<compile_context>
chip_gen: v5e
topology: v5e:2x2
jax: 0.10.0
libtpu: 0.0.40
codegen_flags: <defaults>
</compile_context>

<pallas_src>
import functools

import jax
import jax.numpy as jnp
from jax.experimental import pallas as pl
from jax.experimental.pallas import tpu as pltpu


def _rmsnorm_kernel(x_ref, w_ref, o_ref, *, eps: float, inv_dim: float):
    # Compute in float32 (matches x.float() in the reference), cast back at end.
    x = x_ref[...].astype(jnp.float32)                       # [tile_rows, dim]
    w = w_ref[...]                                           # [1, dim], already f32
    ss = jnp.sum(x * x, axis=-1, keepdims=True)              # XLU cross-lane reduce
    inv = jax.lax.rsqrt(ss * inv_dim + eps)                  # EUP rsqrt
    o_ref[...] = (x * inv * w).astype(o_ref.dtype)           # .type_as(x)


def _sublane_pack(dtype) -> int:
    # Native sublane packing: 8 rows for 32-bit, 16 for 16-bit, 32 for 8-bit.
    itemsize = jnp.dtype(dtype).itemsize
    return max(8, 32 // max(1, itemsize))


def _choose_row_tile(rows: int, dim: int, dtype) -> int:
    itemsize = jnp.dtype(dtype).itemsize
    pack = _sublane_pack(dtype)
    target_bytes = 2 * 1024 * 1024                           # ~2 MiB per x block
    tile = max(pack, target_bytes // max(1, dim * itemsize))
    # Keep at least ~8 grid steps when there is enough work, so the row axis
    # still shards across TensorCores (v7x) and the pipeline stays busy.
    min_steps = 8
    if rows > pack * min_steps:
        tile = min(tile, pl.cdiv(rows, min_steps))
    tile = min(tile, rows)
    # Round up to a multiple of the sublane pack (unmasked, lane-dense stores).
    tile = ((tile + pack - 1) // pack) * pack
    return int(tile)


def rmsnorm(x: jax.Array, weight: jax.Array, eps: float = 1e-8,
            row_tile: int | None = None) -> jax.Array:
    """RMSNorm over the last axis. x: [..., dim], weight: [dim]."""
    orig_shape = x.shape
    dim = orig_shape[-1]
    assert weight.shape == (dim,)

    x2 = x.reshape(-1, dim)                                   # [rows, dim]
    rows = x2.shape[0]
    if row_tile is None:
        row_tile = _choose_row_tile(rows, dim, x.dtype)

    # Weight cast once here (tiny); stays VMEM-resident via constant index_map.
    w2 = weight.astype(jnp.float32).reshape(1, dim)

    grid = (pl.cdiv(rows, row_tile),)                         # ragged last block is masked
    itemsize = jnp.dtype(x.dtype).itemsize
    cost = pl.CostEstimate(
        flops=3 * rows * dim,
        transcendentals=rows,
        bytes_accessed=2 * rows * dim * itemsize + dim * 4,
    )

    out = pl.pallas_call(
        functools.partial(_rmsnorm_kernel, eps=eps, inv_dim=1.0 / dim),
        out_shape=jax.ShapeDtypeStruct((rows, dim), x.dtype),
        grid_spec=pltpu.PrefetchScalarGridSpec(
            num_scalar_prefetch=0,
            grid=grid,
            in_specs=[
                pl.BlockSpec((row_tile, dim), lambda i: (i, 0)),
                pl.BlockSpec((1, dim), lambda i: (0, 0)),
            ],
            out_specs=pl.BlockSpec((row_tile, dim), lambda i: (i, 0)),
        ),
        compiler_params=pltpu.CompilerParams(
            dimension_semantics=("parallel",),
            vmem_limit_bytes=48 * 1024 * 1024,
        ),
        cost_estimate=cost,
    )(x2, w2)

    return out.reshape(orig_shape)


def rmsnorm_ref(x, weight, eps=1e-8):
    xf = x.astype(jnp.float32)
    ms = jnp.mean(xf * xf, axis=-1, keepdims=True)
    out = xf * jax.lax.rsqrt(ms + eps)
    return (out * weight.astype(jnp.float32)).astype(x.dtype)


if __name__ == "__main__":
    key = jax.random.PRNGKey(0)

    # Deterministic parameter init: nn.Parameter(torch.ones(dim))
    hidden = 256
    weight = jnp.ones((hidden,), dtype=jnp.float32)

    # Case 1: f32, tile-divisible rows.
    batch, seq = 2, 8
    kx, key = jax.random.split(key)
    x = jax.random.normal(kx, (batch, seq, hidden), dtype=jnp.float32)
    y = rmsnorm(x, weight, eps=1e-8)
    jax.block_until_ready(y)
    y_ref = rmsnorm_ref(x, weight, eps=1e-8)
    assert y.shape == x.shape and y.dtype == x.dtype
    assert jnp.allclose(y, y_ref, atol=1e-5, rtol=1e-5)

    # Case 2: ragged row count (exercises the masked last block, no pad/slice).
    kx, key = jax.random.split(key)
    x2 = jax.random.normal(kx, (3, 5, hidden), dtype=jnp.float32)
    y2 = rmsnorm(x2, weight, eps=1e-8)
    jax.block_until_ready(y2)
    y2_ref = rmsnorm_ref(x2, weight, eps=1e-8)
    assert jnp.allclose(y2, y2_ref, atol=1e-5, rtol=1e-5)

    # Case 3: bf16 input (16-row sublane pack, f32 internal math, cast back).
    kx, key = jax.random.split(key)
    x3 = jax.random.normal(kx, (2, 8, hidden), dtype=jnp.bfloat16)
    y3 = rmsnorm(x3, weight, eps=1e-8)
    jax.block_until_ready(y3)
    y3_ref = rmsnorm_ref(x3, weight, eps=1e-8)
    assert y3.dtype == jnp.bfloat16
    assert jnp.allclose(y3.astype(jnp.float32), y3_ref.astype(jnp.float32),
                        atol=2e-2, rtol=2e-2)

    print("KERNEL_OK")
</pallas_src>

<mosaic_0001>
module attributes {stable_mosaic.version = 11 : i64} {
  func.func @_rmsnorm_kernel(%arg0: i32, %arg1: memref<16x256xf32, #tpu.memory_space<vmem>>, %arg2: memref<1x256xf32, #tpu.memory_space<vmem>>, %arg3: memref<16x256xf32, #tpu.memory_space<vmem>>) attributes {dimension_semantics = [#tpu.dimension_semantics<parallel>], iteration_bounds = array<i64: 1>, scalar_prefetch = 0 : i64, scratch_operands = 0 : i64, tpu.core_type = #tpu.core_type<tc>, window_params = [{transform_indices = @transform_0, window_bounds = array<i64: 16, 256>}, {pipeline_mode = #tpu.pipeline_mode<synchronous>, transform_indices = @transform_1, window_bounds = array<i64: 1, 256>}, {transform_indices = @transform_2, window_bounds = array<i64: 16, 256>}]} {
    %c0 = arith.constant 0 : index
    %c0_0 = arith.constant 0 : index
    %0 = vector.load %arg1[%c0, %c0_0] : memref<16x256xf32, #tpu.memory_space<vmem>>, vector<16x256xf32>
    %c0_1 = arith.constant 0 : index
    %c0_2 = arith.constant 0 : index
    %1 = vector.load %arg2[%c0_1, %c0_2] : memref<1x256xf32, #tpu.memory_space<vmem>>, vector<1x256xf32>
    %2 = arith.mulf %0, %0 : vector<16x256xf32>
    %cst = arith.constant dense<0.000000e+00> : vector<16xf32>
    %3 = vector.multi_reduction <add>, %2, %cst [1] : vector<16x256xf32> to vector<16xf32>
    %4 = vector.shape_cast %3 : vector<16xf32> to vector<16x1xf32>
    %cst_3 = arith.constant 3.906250e-03 : f32
    %5 = vector.broadcast %cst_3 : f32 to vector<16x1xf32>
    %6 = arith.mulf %4, %5 : vector<16x1xf32>
    %cst_4 = arith.constant 9.99999993E-9 : f32
    %7 = vector.broadcast %cst_4 : f32 to vector<16x1xf32>
    %8 = arith.addf %6, %7 : vector<16x1xf32>
    %9 = math.rsqrt %8 : vector<16x1xf32>
    %10 = vector.broadcast %9 : vector<16x1xf32> to vector<16x256xf32>
    %11 = arith.mulf %0, %10 : vector<16x256xf32>
    %12 = vector.broadcast %1 : vector<1x256xf32> to vector<16x256xf32>
    %13 = arith.mulf %11, %12 : vector<16x256xf32>
    %c0_5 = arith.constant 0 : index
    %c0_6 = arith.constant 0 : index
    %14 = vector.load %arg3[%c0_5, %c0_6] : memref<16x256xf32, #tpu.memory_space<vmem>>, vector<16x256xf32>
    tpu.vector_store %arg3[%c0_5, %c0_6], %13 {strides = array<i32>} : memref<16x256xf32, #tpu.memory_space<vmem>>, vector<16x256xf32>,
    return
  }
  func.func @transform_0(%arg0: i32) -> (i32, i32) {
    %c0_i32 = arith.constant 0 : i32
    %c0_i32_0 = arith.constant 0 : i32
    return %arg0, %c0_i32 : i32, i32
  }
  func.func @transform_1(%arg0: i32) -> (i32, i32) {
    %c0_i32 = arith.constant 0 : i32
    %c0_i32_0 = arith.constant 0 : i32
    %c0_i32_1 = arith.constant 0 : i32
    return %c0_i32, %c0_i32_0 : i32, i32
  }
  func.func @transform_2(%arg0: i32) -> (i32, i32) {
    %c0_i32 = arith.constant 0 : i32
    %c0_i32_0 = arith.constant 0 : i32
    return %arg0, %c0_i32 : i32, i32
  }
}

</mosaic_0001>

<llo_original>
// kernel: tpu_custom_call.1
$region0: #{tpu_custom_call.1}
  #allocation0 [shape = 'u32[]', space=smem, size = 0x4, offset = 0x4, fixed_abs, tag = 'smem constant byte address 0x4 - core index']
  #allocation1 [shape = 'u32[72,128]{1,0:T(1,128)}', space=vmem, size = 0x9000, scoped, tag = 'internal scratch']
  %s0 = inlined_call_operand.hbm [shape: f32[16,256], index: 0, kind: input, shape index: {}]
  %s1 = inlined_call_operand.hbm [shape: f32[1,256], index: 1, kind: input, shape index: {}]
  %s2 = inlined_call_operand.hbm [shape: f32[16,256], index: 2, kind: output, shape index: {}]
  %s3 = sld [smem:[#allocation0]]
  $region26: #{tpu_custom_call.1} parent=0
    _
  %s5 = ssub.s32 1, %s3
  %s6 = scalar_select 0, %s5, %s3
  $region1: #{tpu_custom_call.1} parent=0
    #allocation2 [shape = 'u8[16384]{0}', space=vmem, size = 0x4000, scoped, tag = 'input window, operand 0, single buffered']
    #allocation3 [shape = 's32[1]{0}', space=sflag, size = 0x4, scoped, tag = 'scoped memory for tpu_custom_call.1']
    #allocation4 [shape = 's32[1]{0}', space=sflag, size = 0x4, scoped, tag = 'scoped memory for tpu_custom_call.1']
    #allocation5 [shape = 'u8[1024]{0}', space=vmem, size = 0x400, scoped, tag = 'input window, operand 1, single buffered']
    #allocation6 [shape = 's32[1]{0}', space=sflag, size = 0x4, scoped, tag = 'scoped memory for tpu_custom_call.1']
    #allocation7 [shape = 'u8[16384]{0}', space=vmem, size = 0x4000, scoped, tag = 'output window, operand 0, single buffered']
    %7 = vsyncpa [#allocation3], 0
    %8 = vsyncpa [#allocation6], 0
    %9 = vsyncpa [#allocation4], 0
    // Predicated region
    $region2: #{tpu_custom_call.1} parent=1 // pred_check
      _
    $region3: #{tpu_custom_call.1} parent=1 // pred_check_branch
      %11 = sbr.rel (0) target = $region5
    $region4: #{tpu_custom_call.1} parent=1 // pred_region
      %13 = vsyncadd [#allocation3], 0
      %s14 = sshll.u32 %s0, 4
      %s15 = int_to_ptr.hbm [resolvable:$true] %s14
      %s16 = sshll.u32 [#allocation2], 4
      %s17 = int_to_ptr.vmem [resolvable:$true] %s16
      %22 = dma.hbm_to_vmem [thread:$0]  %s15, 512, %s17, [#allocation3], 256, 256, 16
    $region5: #{tpu_custom_call.1} parent=1 // pred_fallthru
      _
    // Predicated region
    $region6: #{tpu_custom_call.1} parent=1 // pred_check
      _
    $region7: #{tpu_custom_call.1} parent=1 // pred_check_branch
      %24 = sbr.rel (0) target = $region9
    $region8: #{tpu_custom_call.1} parent=1 // pred_region
      %26 = vsyncadd [#allocation6], 0
      %s28 = sshll.u32 %s1, 4
      %s29 = int_to_ptr.hbm [resolvable:$true] %s28
      %s30 = sshll.u32 [#allocation5], 4
      %s31 = int_to_ptr.vmem [resolvable:$true] %s30
      %33 = dma.hbm_to_vmem [thread:$0]  %s29, 32, %s31, [#allocation6]
    $region9: #{tpu_custom_call.1} parent=1 // pred_fallthru
      _
    // Predicated region
    $region10: #{tpu_custom_call.1} parent=1 // pred_check
      _
    $region11: #{tpu_custom_call.1} parent=1 // pred_check_branch
      %35 = sbr.rel (0) target = $region13
    $region12: #{tpu_custom_call.1} parent=1 // pred_region
      %37 = dma.done [#allocation3], 512
    $region13: #{tpu_custom_call.1} parent=1 // pred_fallthru
      _
    // Predicated region
    $region14: #{tpu_custom_call.1} parent=1 // pred_check
      _
    $region15: #{tpu_custom_call.1} parent=1 // pred_check_branch
      %39 = sbr.rel (0) target = $region17
    $region16: #{tpu_custom_call.1} parent=1 // pred_region
      %41 = dma.done [#allocation6], 32
    $region17: #{tpu_custom_call.1} parent=1 // pred_fallthru
      _
    %v42 = vld [vmem:[#allocation2] sm:$0xff]
    %v43 = vld [vmem:[#allocation2 + $0x8] sm:$0xff]
    %v44 = vld [vmem:[#allocation2 + $0x10] sm:$0xff]
    %v45 = vld [vmem:[#allocation2 + $0x18] sm:$0xff]
    %v46 = vld [vmem:[#allocation5] sm:$0x3]
    %v47 = vmul.f32 %v42, %v42
    %v48 = vmul.f32 %v43, %v43
    %v49 = vmul.f32 %v44, %v44
    %v50 = vmul.f32 %v45, %v45
    %v51 = vadd.f32 %v47, %v48
    %52 = vadd.xlane.f32.xlu0 %v51
    %v53 = vpop.xlane.xlu0 %52
    %v54 = vadd.f32 %v49, %v50
    %55 = vadd.xlane.f32.xlu0 %v54
    %v56 = vpop.xlane.xlu0 %55
    %v57 = vmul.f32 %v53, 0.00390625
    %v58 = vmul.f32 %v56, 0.00390625
    %v59 = vadd.f32 %v57, 1e-08
    %v60 = vadd.f32 %v58, 1e-08
    %v61 = vrsqrt.pop %v59
    %v62 = vmul.f32 %v61, %v59
    %v63 = vmul.f32 %v62, %v61
    %v64 = vmul.f32 0.5, %v63
    %v65 = vsub.f32 1.5, %v64
    %v66 = vmul.f32 %v61, %v65
    %vm67 = vweird.f32 %v59
    %vm68 = vweird.f32 %v61
    %vm69 = vmor %vm67, %vm68
    %v70 = vsel %vm69, %v61, %v66
    %v71 = vrsqrt.pop %v60
    %v72 = vmul.f32 %v71, %v60
    %v73 = vmul.f32 %v72, %v71
    %v74 = vmul.f32 0.5, %v73
    %v75 = vsub.f32 1.5, %v74
    %v76 = vmul.f32 %v71, %v75
    %vm77 = vweird.f32 %v60
    %vm78 = vweird.f32 %v71
    %vm79 = vmor %vm77, %vm78
    %v80 = vsel %vm79, %v71, %v76
    %v81 = vmul.f32 %v42, %v70
    %v82 = vmul.f32 %v43, %v70
    %v83 = vmul.f32 %v44, %v80
    %v84 = vmul.f32 %v45, %v80
    %v86 = vperm.slane %v46, 0
    %v87 = vperm.slane %v46, 1
    %v90 = vmul.f32 %v81, %v86
    %v91 = vmul.f32 %v82, %v87
    %v92 = vmul.f32 %v83, %v86
    %v93 = vmul.f32 %v84, %v87
    %94 = vst [vmem:[#allocation7] sm:$0xff] %v90
    %95 = vst [vmem:[#allocation7 + $0x8] sm:$0xff] %v91
    %96 = vst [vmem:[#allocation7 + $0x10] sm:$0xff] %v92
    %97 = vst [vmem:[#allocation7 + $0x18] sm:$0xff] %v93
    // Predicated region
    $region18: #{tpu_custom_call.1} parent=1 // pred_check
      _
    $region19: #{tpu_custom_call.1} parent=1 // pred_check_branch
      %99 = sbr.rel (0) target = $region21
    $region20: #{tpu_custom_call.1} parent=1 // pred_region
      %101 = vsyncadd [#allocation4], 0
      %s102 = sshll.u32 [#allocation7], 4
      %s103 = int_to_ptr.vmem [resolvable:$true] %s102
      %s104 = sshll.u32 %s2, 4
      %s105 = int_to_ptr.hbm [resolvable:$true] %s104
      %110 = dma.vmem_to_hbm [thread:$0]  %s103, 512, %s105, [#allocation4], 256, 256, 16
    $region21: #{tpu_custom_call.1} parent=1 // pred_fallthru
      _
    // Predicated region
    $region22: #{tpu_custom_call.1} parent=1 // pred_check
      _
    $region23: #{tpu_custom_call.1} parent=1 // pred_check_branch
      %112 = sbr.rel (0) target = $region25
    $region24: #{tpu_custom_call.1} parent=1 // pred_region
      %114 = dma.done [#allocation4], 512
    $region25: #{tpu_custom_call.1} parent=1 // pred_fallthru
      _
    %115 = vsyncpa [#allocation3], 1
    %116 = vsyncpa [#allocation6], 1
    %117 = vsyncpa [#allocation4], 1

</llo_original>
